<compile_context>
chip_gen: v7x
topology: tpu7x:2x2x1
jax: 0.10.0
libtpu: 0.0.40
codegen_flags: <defaults>
</compile_context>

<pallas_src>
import math

import numpy as np
import jax
import jax.numpy as jnp
from jax.experimental import pallas as pl
from jax.experimental.pallas import tpu as pltpu


def _value_embedding_kernel(x_ref, w_ref, b_ref, o_ref):
    # x_ref: (tile_rows, G*C)   w_ref: (G*C, G*D)   b_ref: (1, G*D)
    # o_ref: (tile_rows, G*D)   -- lane-dense when G*D ~ 128
    acc = jnp.dot(x_ref[...], w_ref[...], preferred_element_type=jnp.float32)
    o_ref[...] = (acc + b_ref[...]).astype(o_ref.dtype)


def _round_up(a, b):
    return -(-a // b) * b


def value_embedding_pallas(x, weight, bias, *, tile_rows=2048,
                           out_dtype=jnp.float32):
    """x: (B, C, H, W); weight: (D, C) (Conv2d 1x1); bias: (D,).

    Returns Conv2d(x).permute(0, 3, 2, 1) == (B, W, H, D) in `out_dtype`.
    """
    B, C, H, W = x.shape
    D = weight.shape[0]
    assert weight.shape == (D, C), weight.shape
    assert bias.shape == (D,), bias.shape

    # ---- pixel-packing factor: G h-consecutive pixels per matmul row so the
    # output row width is G*D (lane dense when D < 128).  G must divide H so a
    # packed group never straddles a (b, w) boundary; otherwise fall back.
    G = max(1, 128 // D) if D < 128 else 1
    while G > 1 and H % G != 0:
        G -= 1

    M = B * W * H                      # total pixels
    rows = M // G                      # packed matmul rows (G | H  =>  G | M)
    CG, DG = G * C, G * D

    # Rows in (b, w, h) order == the permuted output ordering, so the kernel's
    # (rows, G*D) result reshapes to (B, W, H, D) with zero copies.  The
    # transpose itself is a candidate for operand fusion (allow_input_fusion).
    x_rows = jnp.transpose(x.astype(jnp.float32), (0, 3, 2, 1)).reshape(rows, CG)

    # Block-diagonal weight: block g maps pixel g's C channels to its D slot.
    w_t = weight.astype(jnp.float32).T                         # (C, D)
    w_blk = jnp.kron(jnp.eye(G, dtype=jnp.float32), w_t)       # (G*C, G*D)
    b_blk = jnp.tile(bias.astype(jnp.float32), G).reshape(1, DG)

    # ---- tile-size selection ------------------------------------------------
    out_itemsize = np.dtype(out_dtype).itemsize
    # lane-padded VMEM bytes per row for the double-buffered in/out tiles
    bytes_per_row = 4 * _round_up(CG, 128) + out_itemsize * _round_up(DG, 128)

    t = max(8, min(tile_rows, _round_up(rows, 8)))
    t = _round_up(t, 8)
    # keep 2x (double-buffered) in+out tiles comfortably inside scoped VMEM
    while t > 256 and 2 * t * bytes_per_row > 24 * (1 << 20):
        t //= 2
    # give the two v7x TensorCores balanced work when the problem allows it
    if rows > 8 and pl.cdiv(rows, t) < 2:
        t = _round_up(pl.cdiv(rows, 2), 8)
    num_tiles = pl.cdiv(rows, t)

    vmem_limit = int(min(64 * (1 << 20),
                         max(32 * (1 << 20), 3 * t * bytes_per_row)))

    out = pl.pallas_call(
        _value_embedding_kernel,
        out_shape=jax.ShapeDtypeStruct((rows, DG), out_dtype),
        grid_spec=pltpu.PrefetchScalarGridSpec(
            num_scalar_prefetch=0,
            grid=(num_tiles,),
            in_specs=[
                pl.BlockSpec((t, CG), lambda i: (i, 0)),    # packed pixel rows
                pl.BlockSpec((CG, DG), lambda i: (0, 0)),   # block-diag weight
                pl.BlockSpec((1, DG), lambda i: (0, 0)),    # packed bias
            ],
            out_specs=pl.BlockSpec((t, DG), lambda i: (i, 0)),
        ),
        compiler_params=pltpu.CompilerParams(
            dimension_semantics=("parallel",),   # shard row tiles across TCs
            vmem_limit_bytes=vmem_limit,
            allow_input_fusion=[True, False, False],
        ),
    )(x_rows, w_blk, b_blk)

    # Same flat layout -> free reshape (no transpose, no slice: out_shape is exact).
    return out.reshape(B, W, H, D)


def value_embedding(x, weight, bias, *, min_pixels=1 << 15, **kwargs):
    """Dispatcher: tiny problems are left to XLA (fused einsum+bias+transpose);
    the Pallas kernel only pays off once the pixel count amortizes the
    per-grid-step overhead and HBM streaming dominates."""
    B, C, H, W = x.shape
    if B * H * W < min_pixels:
        y = jnp.einsum('bchw,dc->bdhw', x, weight) + bias[None, :, None, None]
        return jnp.transpose(y, (0, 3, 2, 1))
    return value_embedding_pallas(x, weight, bias, **kwargs)


def reference(x, weight, bias):
    y = jnp.einsum('bchw,dc->bdhw', x, weight) + bias[None, :, None, None]
    return jnp.transpose(y, (0, 3, 2, 1))


if __name__ == "__main__":
    # Small shapes consistent with the module: x = (batch, c_in, num_node, seq).
    B, C_IN, NUM_NODE, SEQ, D_MODEL = 2, 4, 16, 8, 32

    key = jax.random.PRNGKey(0)
    kx, kw, kb = jax.random.split(key, 3)

    x = jax.random.normal(kx, (B, C_IN, NUM_NODE, SEQ), dtype=jnp.float32)

    # Conv2d(c_in -> d_model, 1x1) weights; PyTorch default init bounds.
    bound = 1.0 / math.sqrt(C_IN)  # fan_in = c_in * 1 * 1
    Wq = jax.random.uniform(kw, (D_MODEL, C_IN), minval=-bound, maxval=bound,
                            dtype=jnp.float32)
    bq = jax.random.uniform(kb, (D_MODEL,), minval=-bound, maxval=bound,
                            dtype=jnp.float32)

    # jit so the x relayout can be fused into the pallas operand
    # (allow_input_fusion); force the Pallas path for this demo.
    out = jax.jit(value_embedding_pallas)(x, Wq, bq)
    out = jax.block_until_ready(out)

    ref = reference(x, Wq, bq)
    assert out.shape == (B, SEQ, NUM_NODE, D_MODEL), out.shape
    assert jnp.allclose(out, ref, atol=5e-5, rtol=5e-5), \
        f"mismatch vs. reference (max err {float(jnp.max(jnp.abs(out - ref)))})"

    print("KERNEL_OK")
</pallas_src>

<mosaic_0001>
module attributes {stable_mosaic.version = 11 : i64} {
  func.func @_value_embedding_kernel(%arg0: i32, %arg1: memref<32x16xf32, #tpu.memory_space<vmem>>, %arg2: memref<16x128xf32, #tpu.memory_space<vmem>>, %arg3: memref<1x128xf32, #tpu.memory_space<vmem>>, %arg4: memref<32x128xf32, #tpu.memory_space<vmem>>) attributes {dimension_semantics = [#tpu.dimension_semantics<parallel>], iteration_bounds = array<i64: 2>, scalar_prefetch = 0 : i64, scratch_operands = 0 : i64, tpu.core_type = #tpu.core_type<tc>, window_params = [{transform_indices = @transform_0, window_bounds = array<i64: 32, 16>}, {pipeline_mode = #tpu.pipeline_mode<synchronous>, transform_indices = @transform_1, window_bounds = array<i64: 16, 128>}, {pipeline_mode = #tpu.pipeline_mode<synchronous>, transform_indices = @transform_2, window_bounds = array<i64: 1, 128>}, {transform_indices = @transform_3, window_bounds = array<i64: 32, 128>}]} {
    %c0 = arith.constant 0 : index
    %c0_0 = arith.constant 0 : index
    %0 = vector.load %arg1[%c0, %c0_0] : memref<32x16xf32, #tpu.memory_space<vmem>>, vector<32x16xf32>
    %c0_1 = arith.constant 0 : index
    %c0_2 = arith.constant 0 : index
    %1 = vector.load %arg2[%c0_1, %c0_2] : memref<16x128xf32, #tpu.memory_space<vmem>>, vector<16x128xf32>
    %cst = arith.constant dense<0.000000e+00> : vector<32x128xf32>
    %2 = tpu.matmul %0, %1, %cst {dimension_numbers = #tpu.dot_dimension_numbers<[1], [0], [0], [1], [0, 0, 1, 1], [], []>} : vector<32x16xf32>, vector<16x128xf32>, vector<32x128xf32> -> vector<32x128xf32>
    %c0_3 = arith.constant 0 : index
    %c0_4 = arith.constant 0 : index
    %3 = vector.load %arg3[%c0_3, %c0_4] : memref<1x128xf32, #tpu.memory_space<vmem>>, vector<1x128xf32>
    %4 = vector.broadcast %3 : vector<1x128xf32> to vector<32x128xf32>
    %5 = arith.addf %2, %4 : vector<32x128xf32>
    %c0_5 = arith.constant 0 : index
    %c0_6 = arith.constant 0 : index
    %6 = vector.load %arg4[%c0_5, %c0_6] : memref<32x128xf32, #tpu.memory_space<vmem>>, vector<32x128xf32>
    tpu.vector_store %arg4[%c0_5, %c0_6], %5 {strides = array<i32>} : memref<32x128xf32, #tpu.memory_space<vmem>>, vector<32x128xf32>,
    return
  }
  func.func @transform_0(%arg0: i32) -> (i32, i32) {
    %c0_i32 = arith.constant 0 : i32
    %c0_i32_0 = arith.constant 0 : i32
    return %arg0, %c0_i32 : i32, i32
  }
  func.func @transform_1(%arg0: i32) -> (i32, i32) {
    %c0_i32 = arith.constant 0 : i32
    %c0_i32_0 = arith.constant 0 : i32
    %c0_i32_1 = arith.constant 0 : i32
    return %c0_i32, %c0_i32_0 : i32, i32
  }
  func.func @transform_2(%arg0: i32) -> (i32, i32) {
    %c0_i32 = arith.constant 0 : i32
    %c0_i32_0 = arith.constant 0 : i32
    %c0_i32_1 = arith.constant 0 : i32
    return %c0_i32, %c0_i32_0 : i32, i32
  }
  func.func @transform_3(%arg0: i32) -> (i32, i32) {
    %c0_i32 = arith.constant 0 : i32
    %c0_i32_0 = arith.constant 0 : i32
    return %arg0, %c0_i32 : i32, i32
  }
}

</mosaic_0001>

<llo_original>
// kernel: tile.8
$region0: #{tile.8}
  #allocation0 [shape = 's32[1]{0}', space=sflag, size = 0x4, scoped, tag = 'scoped memory for tile.8']
  %s0 = inlined_call_operand.vmem [shape: f32[32], index: 0, kind: input, shape index: {}]
  %s1 = inlined_call_operand.vmem [shape: f32[4,32], index: 1, kind: output, shape index: {}]
  // Predicated region
  $region2: #{tile.8} parent=0 // pred_check
    _
  $region3: #{tile.8} parent=0 // pred_check_branch
    %3 = sbr.rel (0) target = $region5
  $region4: #{tile.8} parent=0 // pred_region
    _
  $region5: #{tile.8} parent=0 // pred_fallthru
    _
  %v4 = vld [vmem:[%s0] ss:$0 sm:$0xff]
  %5 = vst [vmem:[%s1] sm:$0xf] %v4

// kernel: tile.9
$region0: #{tile.9}
  %s0 = inlined_call_operand.vmem [shape: f32[4,32], index: 0, kind: input, shape index: {}]
  %s1 = inlined_call_operand.vmem [shape: f32[1,128], index: 1, kind: output, shape index: {}]
  $region1: #{tile.9} parent=0
    #allocation0 [shape = 'u8[4096]{0}', space=vmem, size = 0x1000, scoped, tag = 'scoped mem for output reshape']
    #allocation1 [shape = 'u8[4096]{0}', space=vmem, size = 0x1000, scoped, tag = 'scoped mem for input reshape']
    %s3 = sshllo.u32 0, 4
    %v4 = vld [vmem:[%s0] sm:%s3]
    %5 = vst [vmem:[#allocation1] sm:%s3] %v4
    %v6 = vld [vmem:[#allocation1] sm:$0x1]
    %vm7 = vcmask 261120
    %8 = vst.msk [vmem:[#allocation0] sm:$0x1] %vm7, %v6
    %s9 = scalar_lea.vmem [#allocation1], 3
    %v10 = vld [vmem:[%s9] sm:$0x1]
    %11 = vrot.lane.b32.xlu0 %v10, 96
    %v12 = vpop.permute.xlu0 %11
    %vm13 = vcmask 1048320
    %14 = vst.msk [vmem:[#allocation0] sm:$0x1] %vm13, %v12
    %s15 = scalar_lea.vmem [#allocation1], 2
    %v16 = vld [vmem:[%s15] sm:$0x1]
    %17 = vrot.lane.b32.xlu0 %v16, 64
    %v18 = vpop.permute.xlu0 %17
    %vm19 = vcmask 785920
    %20 = vst.msk [vmem:[#allocation0] sm:$0x1] %vm19, %v18
    %s21 = scalar_lea.vmem [#allocation1], 1
    %v22 = vld [vmem:[%s21] sm:$0x1]
    %23 = vrot.lane.b32.xlu0 %v22, 32
    %v24 = vpop.permute.xlu0 %23
    %vm25 = vcmask 523520
    %26 = vst.msk [vmem:[#allocation0] sm:$0x1] %vm25, %v24
    %s28 = sshllo.u32 0, 1
    %v30 = vld [vmem:[#allocation0] sm:%s28]
    %s31 = sshllo.u32 0, 1
    %32 = vst [vmem:[%s1] sm:%s31] %v30

// kernel: value_embedding_pallas.1
$region0: #{value_embedding_pallas.1}
  #allocation0 [shape = 'u32[]', space=smem, size = 0x4, offset = 0x4, fixed_abs, tag = 'smem constant byte address 0x4 - core index']
  #allocation1 [shape = 'u32[144,128]{1,0:T(1,128)}', space=vmem, size = 0x12000, scoped, tag = 'internal scratch']
  %s0 = inlined_call_operand.vmem [shape: f32[64,16], index: 0, kind: input, shape index: {}]
  %s1 = inlined_call_operand.vmem [shape: f32[16,128], index: 1, kind: input, shape index: {}]
  %s2 = inlined_call_operand.vmem [shape: f32[1,128], index: 2, kind: input, shape index: {}]
  %s3 = inlined_call_operand.vmem [shape: f32[64,128], index: 3, kind: output, shape index: {}]
  %s4 = sld [smem:[#allocation0]]
  $region45: #{value_embedding_pallas.1} parent=0
    _
  %s6 = ssub.s32 1, %s4
  %s7 = scalar_select 0, %s6, %s4
  loop: start=0, step=1, limit=4
  $region2: #{value_embedding_pallas.1} parent=0 // loop_pre_header
    _
  $region3: #{value_embedding_pallas.1} parent=0 // loop_header
    %s9 = sphi 0, %s13
    %p10 = scmp.ge.s32.totalorder %s9, 4
    %s19 = sphi 0, %s21
    %s22 = sphi 0, %s19
    %s23 = sphi 0, %s22
    %s39 = sphi 0, %s23
    %s43 = sphi 0, %s43
    %s45 = sphi 0, %s43
    %s46 = sphi 0, %s45
    %s60 = sphi 0, %s46
    %s64 = sphi 0, %s64
    %s66 = sphi 0, %s64
    %s67 = sphi 0, %s66
    %s81 = sphi 0, %s67
    %s87 = sphi 0, %s89
    %s90 = sphi 0, %s87
    %s91 = sphi 0, %s90
    %s107 = sphi 0, %s91
  $region4: #{value_embedding_pallas.1} parent=0 // loop_header_branch
    %12 = sbr.rel (%p10) target = $region8
  $region5: #{value_embedding_pallas.1} parent=0 // loop_body
    %s14 = ssub.s32 %s9, 1
    %s15 = ssub.s32 %s9, 2
    %s16 = sadd.s32 %s9, 1
    %s17 = ssub.s32 %s9, %s16
    %p18 = scmp.eq.s32.totalorder %s17, 0
    %s20 = sadd.s32 %s19, 1
    %s21 = scalar_select %p18, %s19, %s20
    %p24 = pneg %p18
    %p25 = scmp.eq.s32.totalorder %s9, 1
    %p26 = por %p24, %p25
    %p27 = scmp.ne.s32.totalorder %s19, %s22
    %p28 = scmp.eq.s32.totalorder %s9, 0
    %p29 = por %p27, %p28
    %p30 = scmp.ne.s32.totalorder %s19, %s22
    %p31 = scmp.eq.s32.totalorder %s14, 1
    %p32 = por %p30, %p31
    %p33 = scmp.ne.s32.totalorder %s22, %s23
    %p34 = scmp.eq.s32.totalorder %s14, 0
    %p35 = por %p33, %p34
    %p36 = scmp.ne.s32.totalorder %s22, %s23
    %p37 = scmp.eq.s32.totalorder %s15, 1
    %p38 = por %p36, %p37
    %p40 = scmp.ne.s32.totalorder %s23, %s39
    %p41 = scmp.eq.s32.totalorder %s15, 0
    %p42 = por %p40, %p41
    %s44 = sadd.s32 %s43, 1
    %p47 = scmp.eq.s32.totalorder %s9, 1
    %p48 = scmp.ne.s32.totalorder %s43, %s45
    %p49 = scmp.eq.s32.totalorder %s9, 0
    %p50 = por %p48, %p49
    %p51 = scmp.ne.s32.totalorder %s43, %s45
    %p52 = scmp.eq.s32.totalorder %s14, 1
    %p53 = por %p51, %p52
    %p54 = scmp.ne.s32.totalorder %s45, %s46
    %p55 = scmp.eq.s32.totalorder %s14, 0
    %p56 = por %p54, %p55
    %p57 = scmp.ne.s32.totalorder %s45, %s46
    %p58 = scmp.eq.s32.totalorder %s15, 1
    %p59 = por %p57, %p58
    %p61 = scmp.ne.s32.totalorder %s46, %s60
    %p62 = scmp.eq.s32.totalorder %s15, 0
    %p63 = por %p61, %p62
    %s65 = sadd.s32 %s64, 1
    %p68 = scmp.eq.s32.totalorder %s9, 1
    %p69 = scmp.ne.s32.totalorder %s64, %s66
    %p70 = scmp.eq.s32.totalorder %s9, 0
    %p71 = por %p69, %p70
    %p72 = scmp.ne.s32.totalorder %s64, %s66
    %p73 = scmp.eq.s32.totalorder %s14, 1
    %p74 = por %p72, %p73
    %p75 = scmp.ne.s32.totalorder %s66, %s67
    %p76 = scmp.eq.s32.totalorder %s14, 0
    %p77 = por %p75, %p76
    %p78 = scmp.ne.s32.totalorder %s66, %s67
    %p79 = scmp.eq.s32.totalorder %s15, 1
    %p80 = por %p78, %p79
    %p82 = scmp.ne.s32.totalorder %s67, %s81
    %p83 = scmp.eq.s32.totalorder %s15, 0
    %p84 = por %p82, %p83
    %s85 = ssub.s32 %s9, %s16
    %p86 = scmp.eq.s32.totalorder %s85, 0
    %s88 = sadd.s32 %s87, 1
    %s89 = scalar_select %p86, %s87, %s88
    %p92 = pneg %p86
    %p93 = scmp.eq.s32.totalorder %s9, 1
    %p94 = por %p92, %p93
    %p95 = scmp.ne.s32.totalorder %s87, %s90
    %p96 = scmp.eq.s32.totalorder %s9, 0
    %p97 = por %p95, %p96
    %p98 = scmp.ne.s32.totalorder %s87, %s90
    %p99 = scmp.eq.s32.totalorder %s14, 1
    %p100 = por %p98, %p99
    %p101 = scmp.ne.s32.totalorder %s90, %s91
    %p102 = scmp.eq.s32.totalorder %s14, 0
    %p103 = por %p101, %p102
    %p104 = scmp.ne.s32.totalorder %s90, %s91
    %p105 = scmp.eq.s32.totalorder %s15, 1
    %p106 = por %p104, %p105
    %p108 = scmp.ne.s32.totalorder %s91, %s107
    %p109 = scmp.eq.s32.totalorder %s15, 0
    %p110 = por %p108, %p109
    %p111 = scmp.le.s32.totalorder 1, %s9
    %p112 = scmp.lt.s32.totalorder %s9, 3
    %p113 = pnand %p111, %p112
    %p114 = pneg %p113
    // Predicated region
    $region9: #{value_embedding_pallas.1} parent=5 // pred_check
      _
    $region10: #{value_embedding_pallas.1} parent=5 // pred_check_branch
      %116 = sbr.rel (%p113) target = $region12
    $region11: #{value_embedding_pallas.1} parent=5 // pred_region
      %s117 = ssub.s32 %s9, 1
      // Predicated region
      $region13: #{value_embedding_pallas.1} parent=11 // pred_check
        %p118 = pneg %p56
      $region14: #{value_embedding_pallas.1} parent=11 // pred_check_branch
        %120 = sbr.rel (%p118) target = $region16
      $region15: #{value_embedding_pallas.1} parent=11 // pred_region
        _
      $region16: #{value_embedding_pallas.1} parent=11 // pred_fallthru
        _
      // Predicated region
      $region17: #{value_embedding_pallas.1} parent=11 // pred_check
        %p121 = pneg %p77
      $region18: #{value_embedding_pallas.1} parent=11 // pred_check_branch
        %123 = sbr.rel (%p121) target = $region20
      $region19: #{value_embedding_pallas.1} parent=11 // pred_region
        _
      $region20: #{value_embedding_pallas.1} parent=11 // pred_fallthru
        _
    $region12: #{value_embedding_pallas.1} parent=5 // pred_fallthru
      _
    %p124 = scmp.lt.s32.totalorder %s9, 2
    // Predicated region
    $region21: #{value_embedding_pallas.1} parent=5 // pred_check
      %p125 = pneg %p124
    $region22: #{value_embedding_pallas.1} parent=5 // pred_check_branch
      %127 = sbr.rel (%p125) target = $region24
    $region23: #{value_embedding_pallas.1} parent=5 // pred_region
      // Predicated region
      $region25: #{value_embedding_pallas.1} parent=23 // pred_check
        %p128 = pneg %p29
      $region26: #{value_embedding_pallas.1} parent=23 // pred_check_branch
        %130 = sbr.rel (%p128) target = $region28
      $region27: #{value_embedding_pallas.1} parent=23 // pred_region
        %s131 = smul.u32 4, %s9
        %p132 = scmp.lt.s32.totalorder %s131, 7
        %s133 = scalar_select %p132, %s131, 7
        %s134 = smul.addr %s133, 8
        %s135 = scalar_lea.vmem %s0, %s134
        %s136 = smul.u32 4, %s9
      $region28: #{value_embedding_pallas.1} parent=23 // pred_fallthru
        _
    $region24: #{value_embedding_pallas.1} parent=5 // pred_fallthru
      _
    %p137 = scmp.le.s32.totalorder 1, %s9
    %p138 = scmp.lt.s32.totalorder %s9, 3
    %p139 = pnand %p137, %p138
    %p140 = pneg %p139
    // Predicated region
    $region29: #{value_embedding_pallas.1} parent=5 // pred_check
      _
    $region30: #{value_embedding_pallas.1} parent=5 // pred_check_branch
      %142 = sbr.rel (%p139) target = $region32
    $region31: #{value_embedding_pallas.1} parent=5 // pred_region
      %s143 = ssub.s32 %s9, 1
      %s144 = smul.u32 4, %s14
      %p145 = scmp.lt.s32.totalorder %s144, 7
      %s146 = scalar_select %p145, %s144, 7
      %s147 = smul.addr %s146, 8
      %s148 = scalar_lea.vmem %s0, %s147
      %p149 = pneg %p35
      %p150 = pneg %p32
      %p151 = pneg %p56
      %p152 = pneg %p53
      %p153 = pneg %p77
      %p154 = pneg %p74
      %p155 = pneg %p103
      %p156 = pneg %p100
      %s157 = smul.u32 4, %s14
      %p158 = scmp.lt.s32.totalorder %s157, 7
      %s159 = scalar_select %p158, %s157, 7
      %s160 = smul.addr %s159, 8
      %s161 = scalar_lea.vmem %s3, %s160
      %s162 = smul.u32 4, %s14
      %p163 = scmp.lt.s32.totalorder %s162, 7
      %s164 = scalar_select %p163, %s162, 7
      %s165 = smul.addr %s164, 8
      %s166 = scalar_lea.vmem %s0, %s165
      %s167 = smul.u32 4, %s14
      %s168 = smul.u32 4, %s14
      %p169 = scmp.lt.s32.totalorder %s168, 7
      %s170 = scalar_select %p169, %s168, 7
      %s171 = smul.addr %s170, 8
      %s172 = scalar_lea.vmem %s3, %s171
      %s173 = smul.u32 4, %s14
      %v174 = vld [vmem:[%s166] sm:$0xff]
      %v175 = vld [vmem:[%s166 + $0x8] sm:$0xff]
      %v176 = vld [vmem:[%s166 + $0x10] sm:$0xff]
      %v177 = vld [vmem:[%s166 + $0x18] sm:$0xff]
      %v178 = vld [vmem:[%s1] sm:$0xff]
      %v179 = vld [vmem:[%s1 + $0x8] sm:$0xff]
      %v180 = vld [vmem:[%s2] sm:$0x1]
      %v182 = vlaneseq
      %v183 = vshrl.u32 %v182, 7
      %v184 = vsub.s32 0, %v183
      %v185 = vrot.slane %v180, %v184
      %vm187 = vcmask 130048
      %v189 = vsel %vm187, %v174, 0
      %v192 = vsel %vm187, %v175, 0
      %v195 = vsel %vm187, %v176, 0
      %v198 = vsel %vm187, %v177, 0
      %200 = vmatprep.subr.mxu0 0.0
      %201 = vmatpush1.msra.mxu0 %v178
      %202 = vmatprep.subr.mxu0 0.0
      %203 = vmatpush1.msra.mxu0 %v179
      %204 = vmatprep.subr.mxu0 0.0
      %205 = vmatpush1.msra.mxu0 0.0
      %206 = vmatprep.subr.mxu0 0.0
      %207 = vmatpush1.msra.mxu0 0.0
      %208 = vmatprep.subr.mxu0 0.0
      %209 = vmatpush1.msra.mxu0 0.0
      %210 = vmatprep.subr.mxu0 0.0
      %211 = vmatpush1.msra.mxu0 0.0
      %212 = vmatprep.subr.mxu0 0.0
      %213 = vmatpush1.msra.mxu0 0.0
      %214 = vmatprep.subr.mxu0 0.0
      %215 = vmatpush1.msra.mxu0 0.0
      %216 = vmatprep.subr.mxu0 0.0
      %217 = vmatpush1.msra.mxu0 0.0
      %218 = vmatprep.subr.mxu0 0.0
      %219 = vmatpush1.msra.mxu0 0.0
      %220 = vmatprep.subr.mxu0 0.0
      %221 = vmatpush1.msra.mxu0 0.0
      %222 = vmatprep.subr.mxu0 0.0
      %223 = vmatpush1.msra.mxu0 0.0
      %224 = vmatprep.subr.mxu0 0.0
      %225 = vmatpush1.msra.mxu0 0.0
      %226 = vmatprep.subr.mxu0 0.0
      %227 = vmatpush1.msra.mxu0 0.0
      %228 = vmatprep.subr.mxu0 0.0
      %229 = vmatpush1.msra.mxu0 0.0
      %230 = vmatprep.subr.mxu0 0.0
      %231 = vmatpush1.msra.mxu0 0.0
      %232 = vmatprep.subr.mxu0 0.0
      %233 = vmatpush1.msra.mxu0 0.0
      %234 = vmatprep.subr.mxu0 0.0
      %235 = vmatpush1.msra.mxu0 0.0
      %236 = vmatprep.subr.mxu0 0.0
      %237 = vmatpush1.msra.mxu0 0.0
      %238 = vmatprep.subr.mxu0 0.0
      %239 = vmatpush1.msra.mxu0 0.0
      %240 = vmatprep.subr.mxu0 0.0
      %241 = vmatpush1.msra.mxu0 0.0
      %242 = vmatprep.subr.mxu0 0.0
      %243 = vmatpush1.msra.mxu0 0.0
      %244 = vmatprep.subr.mxu0 0.0
      %245 = vmatpush1.msra.mxu0 0.0
      %246 = vmatprep.subr.mxu0 0.0
      %247 = vmatpush1.msra.mxu0 0.0
      %248 = vmatprep.subr.mxu0 0.0
      %249 = vmatpush1.msra.mxu0 0.0
      %250 = vmatprep.subr.mxu0 0.0
      %251 = vmatpush1.msra.mxu0 0.0
      %252 = vmatprep.subr.mxu0 0.0
      %253 = vmatpush1.msra.mxu0 0.0
      %254 = vmatprep.subr.mxu0 0.0
      %255 = vmatpush1.msra.mxu0 0.0
      %256 = vmatprep.subr.mxu0 0.0
      %257 = vmatpush1.msra.mxu0 0.0
      %258 = vmatprep.subr.mxu0 0.0
      %259 = vmatpush1.msra.mxu0 0.0
      %260 = vmatprep.subr.mxu0 0.0
      %261 = vmatpush1.msra.mxu0 0.0
      %262 = vmatprep.subr.mxu0 0.0
      %263 = vmatpush1.msra.mxu0 0.0
      %264 = vmatprep.mubr.f32.mxu0 0.0
      %265 = vmatmul.mubr.f32.gmra.mrb[0].mxu0 %v189
      %v266 = vpop.f32.mrb[0].mxu0
      %v267 = vadd.f32 %v185, %v266
      %v268 = vpop.f32.mrb[0].mxu0
      %269 = vmatprep.mubr.f32.mxu0 0.0
      %270 = vmatmul.mubr.f32.gmra.mrb[0].mxu0 %v192
      %v271 = vpop.f32.mrb[0].mxu0
      %v272 = vadd.f32 %v185, %v271
      %v273 = vpop.f32.mrb[0].mxu0
      %274 = vmatprep.mubr.f32.mxu0 0.0
      %275 = vmatmul.mubr.f32.gmra.mrb[0].mxu0 %v195
      %v276 = vpop.f32.mrb[0].mxu0
      %v277 = vadd.f32 %v185, %v276
      %v278 = vpop.f32.mrb[0].mxu0
      %279 = vmatprep.mubr.f32.mxu0 0.0
      %280 = vmatmul.mubr.f32.gmra.mrb[0].mxu0 %v198
      %v281 = vpop.f32.mrb[0].mxu0
      %v282 = vadd.f32 %v185, %v281
      %v283 = vpop.f32.mrb[0].mxu0
      %284 = vdwg.mxu0
      %285 = vst [vmem:[%s172] sm:$0xff] %v267
      %286 = vst [vmem:[%s172 + $0x8] sm:$0xff] %v272
      %287 = vst [vmem:[%s172 + $0x10] sm:$0xff] %v277
      %288 = vst [vmem:[%s172 + $0x18] sm:$0xff] %v282
      %s289 = smul.u32 4, %s14
      %p290 = scmp.lt.s32.totalorder %s289, 7
      %s291 = scalar_select %p290, %s289, 7
      %s292 = smul.addr %s291, 8
      %s293 = scalar_lea.vmem %s3, %s292
      // Predicated region
      $region33: #{value_embedding_pallas.1} parent=31 // pred_check
        %p294 = pneg %p100
      $region34: #{value_embedding_pallas.1} parent=31 // pred_check_branch
        %296 = sbr.rel (%p294) target = $region36
      $region35: #{value_embedding_pallas.1} parent=31 // pred_region
        %s297 = smul.u32 4, %s14
      $region36: #{value_embedding_pallas.1} parent=31 // pred_fallthru
        _
    $region32: #{value_embedding_pallas.1} parent=5 // pred_fallthru
      _
    %p298 = scmp.le.s32.totalorder 2, %s9
    // Predicated region
    $region37: #{value_embedding_pallas.1} parent=5 // pred_check
      %p299 = pneg %p298
    $region38: #{value_embedding_pallas.1} parent=5 // pred_check_branch
      %301 = sbr.rel (%p299) target = $region40
    $region39: #{value_embedding_pallas.1} parent=5 // pred_region
      %s302 = ssub.s32 %s9, 2
      // Predicated region
      $region41: #{value_embedding_pallas.1} parent=39 // pred_check
        %p303 = pneg %p106
      $region42: #{value_embedding_pallas.1} parent=39 // pred_check_branch
        %305 = sbr.rel (%p303) target = $region44
      $region43: #{value_embedding_pallas.1} parent=39 // pred_region
        %s306 = smul.u32 4, %s15
        %p307 = scmp.lt.s32.totalorder %s306, 7
        %s308 = scalar_select %p307, %s306, 7
        %s309 = smul.addr %s308, 8
        %s310 = scalar_lea.vmem %s3, %s309
      $region44: #{value_embedding_pallas.1} parent=39 // pred_fallthru
        _
    $region40: #{value_embedding_pallas.1} parent=5 // pred_fallthru
      _
  $region6: #{value_embedding_pallas.1} parent=0 // loop_footer
    %s13 = sadd.s32 1, %s9
  $region7: #{value_embedding_pallas.1} parent=0 // loop_footer_branch
    %8 = sbr.rel target = $region3
  $region8: #{value_embedding_pallas.1} parent=0 // loop_exit
    _

</llo_original>
